<compile_context>
chip_gen: v7x
topology: tpu7x:2x2x1
jax: 0.10.0
libtpu: 0.0.40
codegen_flags: <defaults>
</compile_context>

<pallas_src>
import jax
import jax.numpy as jnp
from jax.experimental import pallas as pl
from jax.experimental.pallas import tpu as pltpu


# ----------------------------------------------------------------------------
# Chip-aware configuration
# ----------------------------------------------------------------------------
def _chip_config():
    """Returns (n_cores_max, per-input tile bytes, vmem_limit_bytes)."""
    kind = ""
    try:
        kind = jax.devices()[0].device_kind.lower()
    except Exception:
        pass
    if ("v7" in kind) or ("7x" in kind):
        # v7x: 2 TensorCores, only 64 MiB VMEM/TC -> cap tiles at 4 MiB/input
        # (2 inputs x 2 buffers x 4 MiB = 16 MiB of input buffers per TC).
        return 2, 4 * 1024 * 1024, 48 * 1024 * 1024
    if ("v5" in kind) or ("v6" in kind):
        # v5e/v6e: 1 TensorCore, 128 MiB VMEM -> 8 MiB tiles amortize the
        # ~0.35 us per-grid-step overhead (2 x 2 x 8 MiB = 32 MiB buffers).
        return 1, 8 * 1024 * 1024, 64 * 1024 * 1024
    # Unknown chip: conservative, safe everywhere.
    return 1, 4 * 1024 * 1024, 48 * 1024 * 1024


# ----------------------------------------------------------------------------
# Kernel
# ----------------------------------------------------------------------------
def _make_mse_kernel(rows_per_block, lanes, acc_rows, inner, num_blocks,
                     m_rows, needs_mask):
    """Kernel factory closing over static tiling parameters."""

    def fold(v):
        # Fold the (rows_per_block, lanes) tile down to the (acc_rows, lanes)
        # accumulator with pure VPU adds (no cross-lane reduction in the hot
        # loop).
        if rows_per_block == acc_rows:
            return v
        return jnp.sum(
            v.reshape(rows_per_block // acc_rows, acc_rows, lanes), axis=0
        )

    def kernel(x_ref, y_ref, o_ref):
        # Grid = (n_cores [core-parallel on v7x], inner [reduction]).
        p = pl.program_id(0)
        j = pl.program_id(1)

        # o_ref is the per-core (acc_rows, lanes) f32 partial-sum accumulator;
        # it is resident across the reduction axis (index map ignores j).
        @pl.when(j == 0)
        def _():
            o_ref[...] = jnp.zeros_like(o_ref)

        diff = x_ref[...].astype(jnp.float32) - y_ref[...].astype(jnp.float32)
        sq = diff * diff

        if not needs_mask:
            o_ref[...] += fold(sq)
        else:
            # Only the ragged last block pays the masking cost; interior
            # blocks take the plain accumulate branch.
            b = p * inner + j
            is_ragged = b == (num_blocks - 1)

            @pl.when(jnp.logical_not(is_ragged))
            def _():
                o_ref[...] += fold(sq)

            @pl.when(is_ragged)
            def _():
                row0 = b * rows_per_block
                rows = jax.lax.broadcasted_iota(
                    jnp.int32, (rows_per_block, 1), 0
                )
                masked = jnp.where(row0 + rows < m_rows, sq, 0.0)
                o_ref[...] += fold(masked)

    return kernel


# ----------------------------------------------------------------------------
# Pallas wrapper: sum of squared differences over a 2-D (M, lanes) slab
# ----------------------------------------------------------------------------
def _sum_sq_diff_2d(x2d, y2d, *, block_rows=None):
    M, lanes = x2d.shape
    n_cores_max, tile_bytes, vmem_limit = _chip_config()

    min_itemsize = min(x2d.dtype.itemsize, y2d.dtype.itemsize)
    max_itemsize = max(x2d.dtype.itemsize, y2d.dtype.itemsize)

    # Packed-sublane multiple: 8 for 32-bit, 16 for bf16, 32 for int8/fp8.
    sublane_mult = 8 * max(1, 4 // min_itemsize)

    # Dtype-aware tile rows from a per-input byte budget.
    if block_rows is None:
        target_rows = max(sublane_mult, tile_bytes // max_itemsize // lanes)
    else:
        target_rows = max(sublane_mult, block_rows)
    target_rows = (target_rows // sublane_mult) * sublane_mult

    if M <= target_rows:
        rows_per_block = M  # full-extent block is always a legal block shape
    else:
        rows_per_block = target_rows

    num_blocks = pl.cdiv(M, rows_per_block)
    needs_mask = (num_blocks * rows_per_block) != M  # ragged last block only

    # Use the 2-core split only on multi-TC chips and only when it is exact:
    # no phantom blocks, no clamped re-DMA, no extra masking.
    if n_cores_max >= 2 and num_blocks >= 2 and num_blocks % n_cores_max == 0:
        n_cores = n_cores_max
    else:
        n_cores = 1
    inner = num_blocks // n_cores

    # Accumulator tile rows: 8 sublanes normally; full block if tiny/odd.
    acc_rows = 8 if rows_per_block % 8 == 0 else rows_per_block

    kernel = _make_mse_kernel(
        rows_per_block, lanes, acc_rows, inner, num_blocks, M, needs_mask
    )

    def in_index_map(p, j):
        return (p * inner + j, 0)

    if n_cores >= 2:
        sem0 = getattr(pltpu, "CORE_PARALLEL", "parallel")
    else:
        sem0 = "arbitrary"

    out_rows = n_cores * acc_rows
    bytes_in = (
        x2d.size * x2d.dtype.itemsize + y2d.size * y2d.dtype.itemsize
    )
    bytes_out = out_rows * lanes * 4

    partials = pl.pallas_call(
        kernel,
        out_shape=jax.ShapeDtypeStruct((out_rows, lanes), jnp.float32),
        grid_spec=pltpu.PrefetchScalarGridSpec(
            num_scalar_prefetch=0,
            grid=(n_cores, inner),
            in_specs=[
                pl.BlockSpec((rows_per_block, lanes), in_index_map),
                pl.BlockSpec((rows_per_block, lanes), in_index_map),
            ],
            out_specs=pl.BlockSpec((acc_rows, lanes), lambda p, j: (p, 0)),
        ),
        compiler_params=pltpu.CompilerParams(
            dimension_semantics=(sem0, "arbitrary"),
            vmem_limit_bytes=vmem_limit,
        ),
        cost_estimate=pl.CostEstimate(
            flops=3 * x2d.size,
            transcendentals=0,
            bytes_accessed=bytes_in + bytes_out,
        ),
    )(x2d, y2d)

    # Tiny final reduction (at most 16 x 512 f32) done by XLA in the wrapper.
    return jnp.sum(partials)


# ----------------------------------------------------------------------------
# Public entry point (matches torch.mean(torch.pow(output - dist_m, 2)))
# ----------------------------------------------------------------------------
def mse_loss(output, dist_m, *, block_rows=None, force_kernel=False):
    assert output.shape == dist_m.shape, "MSELoss expects matching shapes"
    n_elems = output.size
    out_dtype = jnp.result_type(output.dtype, dist_m.dtype)
    if not jnp.issubdtype(out_dtype, jnp.floating):
        out_dtype = jnp.float32

    if n_elems == 0:
        # torch.mean on an empty tensor returns NaN.
        return jnp.array(jnp.nan, dtype=out_dtype)

    _, tile_bytes, _ = _chip_config()
    itemsize = max(output.dtype.itemsize, dist_m.dtype.itemsize)

    # Small-input bypass: up to ~one DMA tile's worth of data (covers the
    # module's real distance-matrix inputs), a fused XLA reduce is much
    # cheaper than a pallas_call launch + pipeline setup + final sum.
    if not force_kernel and n_elems * itemsize <= tile_bytes:
        d = output.astype(jnp.float32) - dist_m.astype(jnp.float32)
        return (jnp.sum(d * d) / jnp.float32(n_elems)).astype(out_dtype)

    x = output.reshape(-1)
    y = dist_m.reshape(-1)

    # Widest lane width that divides the element count (no padding copies).
    lanes = None
    for cand in (512, 256, 128):
        if n_elems % cand == 0:
            lanes = cand
            break

    tail_ssq = jnp.float32(0.0)
    if lanes is None:
        lanes = 128
        bulk = (n_elems // lanes) * lanes
        if bulk == 0:
            # Tiny input (< 128 elems): a kernel launch buys nothing.
            d = x.astype(jnp.float32) - y.astype(jnp.float32)
            return (jnp.sum(d * d) / jnp.float32(n_elems)).astype(out_dtype)
        # Only the sub-128-element flat remainder is handled outside the
        # kernel; no full-array concat/pad of both inputs.
        tx = x[bulk:].astype(jnp.float32)
        ty = y[bulk:].astype(jnp.float32)
        tail_ssq = jnp.sum((tx - ty) ** 2)
        x = x[:bulk]
        y = y[:bulk]

    M = x.size // lanes
    x2d = x.reshape(M, lanes)
    y2d = y.reshape(M, lanes)

    ssq = _sum_sq_diff_2d(x2d, y2d, block_rows=block_rows) + tail_ssq
    return (ssq / jnp.float32(n_elems)).astype(out_dtype)


if __name__ == "__main__":
    key = jax.random.PRNGKey(0)
    k1, k2, k3, k4, k5, k6, k7, k8, k9, k10 = jax.random.split(key, 10)

    # Main run: small shapes consistent with the module (predicted pairwise
    # distance matrix vs ground-truth distance matrix). Takes the XLA bypass.
    output = jax.random.normal(k1, (8, 32), dtype=jnp.float32)
    dist_m = jax.random.normal(k2, (8, 32), dtype=jnp.float32)
    result = mse_loss(output, dist_m)
    jax.block_until_ready(result)
    ref = jnp.mean((output - dist_m) ** 2)
    assert jnp.allclose(result, ref, rtol=1e-5, atol=1e-6), (result, ref)

    # Kernel path (forced): multiple full blocks, even split (no masking).
    a = jax.random.normal(k3, (256, 512), dtype=jnp.float32)
    b = jax.random.normal(k4, (256, 512), dtype=jnp.float32)
    r2 = mse_loss(a, b, block_rows=64, force_kernel=True)
    jax.block_until_ready(r2)
    ref2 = jnp.mean((a - b) ** 2)
    assert jnp.allclose(r2, ref2, rtol=1e-5, atol=1e-6), (r2, ref2)

    # Kernel path (forced): ragged last block -> pl.when-gated masking.
    c = jax.random.normal(k5, (33, 128), dtype=jnp.float32)
    d = jax.random.normal(k6, (33, 128), dtype=jnp.float32)
    r3 = mse_loss(c, d, block_rows=8, force_kernel=True)
    jax.block_until_ready(r3)
    ref3 = jnp.mean((c - d) ** 2)
    assert jnp.allclose(r3, ref3, rtol=1e-5, atol=1e-6), (r3, ref3)

    # Kernel path (forced): element count not a multiple of 128 -> flat tail.
    e = jax.random.normal(k7, (7, 19), dtype=jnp.float32)
    f = jax.random.normal(k8, (7, 19), dtype=jnp.float32)
    r4 = mse_loss(e, f, force_kernel=True)
    jax.block_until_ready(r4)
    ref4 = jnp.mean((e - f) ** 2)
    assert jnp.allclose(r4, ref4, rtol=1e-5, atol=1e-6), (r4, ref4)

    # Kernel path (forced): bf16 inputs exercise the dtype-aware (16,128)
    # sublane-multiple block rounding.
    g = jax.random.normal(k9, (48, 256), dtype=jnp.bfloat16)
    h = jax.random.normal(k10, (48, 256), dtype=jnp.bfloat16)
    r5 = mse_loss(g, h, block_rows=16, force_kernel=True)
    jax.block_until_ready(r5)
    ref5 = jnp.mean(
        (g.astype(jnp.float32) - h.astype(jnp.float32)) ** 2
    )
    assert jnp.allclose(
        jnp.float32(r5), ref5, rtol=2e-2, atol=2e-2
    ), (r5, ref5)

    print("KERNEL_OK")
</pallas_src>

<mosaic_0001>
module attributes {stable_mosaic.version = 11 : i64} {
  func.func @kernel(%arg0: i32, %arg1: i32, %arg2: memref<64x512xf32, #tpu.memory_space<vmem>>, %arg3: memref<64x512xf32, #tpu.memory_space<vmem>>, %arg4: memref<8x512xf32, #tpu.memory_space<vmem>>) attributes {dimension_semantics = [#tpu.dimension_semantics<arbitrary>, #tpu.dimension_semantics<arbitrary>], iteration_bounds = array<i64: 1, 4>, scalar_prefetch = 0 : i64, scratch_operands = 0 : i64, tpu.core_type = #tpu.core_type<tc>, window_params = [{transform_indices = @transform_0, window_bounds = array<i64: 64, 512>}, {transform_indices = @transform_1, window_bounds = array<i64: 64, 512>}, {transform_indices = @transform_2, window_bounds = array<i64: 8, 512>}]} {
    %c0_i32 = arith.constant 0 : i32
    %0 = arith.cmpi eq, %arg1, %c0_i32 : i32
    %1 = arith.extui %0 : i1 to i32
    %c0_i32_0 = arith.constant 0 : i32
    %2 = arith.cmpi ne, %1, %c0_i32_0 : i32
    scf.if %2 {
      %cst_8 = arith.constant 0.000000e+00 : f32
      %12 = vector.broadcast %cst_8 : f32 to vector<8x512xf32>
      %c0_9 = arith.constant 0 : index
      %c0_10 = arith.constant 0 : index
      %13 = vector.load %arg4[%c0_9, %c0_10] : memref<8x512xf32, #tpu.memory_space<vmem>>, vector<8x512xf32>
      tpu.vector_store %arg4[%c0_9, %c0_10], %12 {strides = array<i32>} : memref<8x512xf32, #tpu.memory_space<vmem>>, vector<8x512xf32>,
    } else {
    }
    %c0 = arith.constant 0 : index
    %c0_1 = arith.constant 0 : index
    %3 = vector.load %arg2[%c0, %c0_1] : memref<64x512xf32, #tpu.memory_space<vmem>>, vector<64x512xf32>
    %c0_2 = arith.constant 0 : index
    %c0_3 = arith.constant 0 : index
    %4 = vector.load %arg3[%c0_2, %c0_3] : memref<64x512xf32, #tpu.memory_space<vmem>>, vector<64x512xf32>
    %5 = arith.subf %3, %4 : vector<64x512xf32>
    %6 = arith.mulf %5, %5 : vector<64x512xf32>
    %c0_4 = arith.constant 0 : index
    %c0_5 = arith.constant 0 : index
    %7 = vector.load %arg4[%c0_4, %c0_5] : memref<8x512xf32, #tpu.memory_space<vmem>>, vector<8x512xf32>
    %8 = vector.shape_cast %6 : vector<64x512xf32> to vector<8x8x512xf32>
    %cst = arith.constant dense<0.000000e+00> : vector<8x512xf32>
    %9 = vector.multi_reduction <add>, %8, %cst [0] : vector<8x8x512xf32> to vector<8x512xf32>
    %10 = arith.addf %7, %9 : vector<8x512xf32>
    %c0_6 = arith.constant 0 : index
    %c0_7 = arith.constant 0 : index
    %11 = vector.load %arg4[%c0_6, %c0_7] : memref<8x512xf32, #tpu.memory_space<vmem>>, vector<8x512xf32>
    tpu.vector_store %arg4[%c0_6, %c0_7], %10 {strides = array<i32>} : memref<8x512xf32, #tpu.memory_space<vmem>>, vector<8x512xf32>,
    return
  }
  func.func @transform_0(%arg0: i32, %arg1: i32) -> (i32, i32) {
    %c4_i32 = arith.constant 4 : i32
    %0 = arith.muli %arg0, %c4_i32 : i32
    %1 = arith.addi %0, %arg1 : i32
    %c0_i32 = arith.constant 0 : i32
    %c0_i32_0 = arith.constant 0 : i32
    return %1, %c0_i32 : i32, i32
  }
  func.func @transform_1(%arg0: i32, %arg1: i32) -> (i32, i32) {
    %c4_i32 = arith.constant 4 : i32
    %0 = arith.muli %arg0, %c4_i32 : i32
    %1 = arith.addi %0, %arg1 : i32
    %c0_i32 = arith.constant 0 : i32
    %c0_i32_0 = arith.constant 0 : i32
    return %1, %c0_i32 : i32, i32
  }
  func.func @transform_2(%arg0: i32, %arg1: i32) -> (i32, i32) {
    %c0_i32 = arith.constant 0 : i32
    %c0_i32_0 = arith.constant 0 : i32
    return %arg0, %c0_i32 : i32, i32
  }
}

</mosaic_0001>

<llo_original>
// kernel: tpu_custom_call.1
$region0: #{tpu_custom_call.1}
  #allocation0 [shape = 'u32[]', space=smem, size = 0x4, offset = 0x4, fixed_abs, tag = 'smem constant byte address 0x4 - core index']
  #allocation1 [shape = 'u32[144,128]{1,0:T(1,128)}', space=vmem, size = 0x12000, scoped, tag = 'internal scratch']
  %s0 = inlined_call_operand.hbm [shape: f32[256,512], index: 0, kind: input, shape index: {}]
  %s1 = inlined_call_operand.hbm [shape: f32[256,512], index: 1, kind: input, shape index: {}]
  %s2 = inlined_call_operand.hbm [shape: f32[8,512], index: 2, kind: output, shape index: {}]
  %s3 = sld [smem:[#allocation0]]
  $region53: #{tpu_custom_call.1} parent=0
    _
  %s5 = ssub.s32 1, %s3
  %s6 = scalar_select 0, %s5, %s3
  $region1: #{tpu_custom_call.1} parent=0
    #allocation2 [shape = 'u8[262144]{0}', space=vmem, size = 0x40000, scoped, tag = 'input window, operand 0']
    #allocation3 [shape = 's32[2]{0}', space=sflag, size = 0x8, scoped, tag = 'scoped memory for tpu_custom_call.1']
    #allocation4 [shape = 's32[2]{0}', space=sflag, size = 0x8, scoped, tag = 'scoped memory for tpu_custom_call.1']
    #allocation5 [shape = 'u8[262144]{0}', space=vmem, size = 0x40000, scoped, tag = 'input window, operand 1']
    #allocation6 [shape = 's32[2]{0}', space=sflag, size = 0x8, scoped, tag = 'scoped memory for tpu_custom_call.1']
    #allocation7 [shape = 'u8[16384]{0}', space=vmem, size = 0x4000, scoped, tag = 'output window, operand 0, single buffered']
    %7 = vsyncpa [#allocation3], 0
    %s8 = scalar_lea.sflag [#allocation3], 1
    %9 = vsyncpa %s8, 0
    %10 = vsyncpa [#allocation6], 0
    %s11 = scalar_lea.sflag [#allocation6], 1
    %12 = vsyncpa %s11, 0
    %13 = vsyncpa [#allocation4], 0
    loop: start=0, step=1, limit=6
    $region2: #{tpu_custom_call.1} parent=1 // loop_pre_header
      _
    $region3: #{tpu_custom_call.1} parent=1 // loop_header
      %s15 = sphi 0, %s19
      %p16 = scmp.ge.s32.totalorder %s15, 6
      %s22 = sphi 0, %s34
      %s23 = sphi 0, %s30
      %s24 = sphi 0, %s22
      %s25 = sphi 0, %s23
      %s26 = sphi 0, %s24
      %s27 = sphi 0, %s25
      %s41 = sphi 0, %s43
      %s44 = sphi 0, %s41
      %s45 = sphi 0, %s44
      %s61 = sphi 0, %s45
      %s71 = sphi 0, %s73
      %s74 = sphi 0, %s71
      %s75 = sphi 0, %s74
      %s91 = sphi 0, %s75
      %s97 = sphi 0, %s99
      %s100 = sphi 0, %s97
      %s101 = sphi 0, %s100
      %s117 = sphi 0, %s101
    $region4: #{tpu_custom_call.1} parent=1 // loop_header_branch
      %18 = sbr.rel (%p16) target = $region8
    $region5: #{tpu_custom_call.1} parent=1 // loop_body
      %s20 = ssub.s32 %s15, 1
      %s21 = ssub.s32 %s15, 2
      %s28 = sadd.s32 1, %s23
      %p29 = scmp.ge.s32.totalorder %s28, 4
      %s30 = scalar_select %p29, 0, %s28
      %s31 = sadd.s32 1, %s22
      %s32 = scalar_select %p29, %s31, %s22
      %p33 = scmp.ge.s32.totalorder %s32, 1
      %s34 = scalar_select %p33, 0, %s32
      %s35 = smul.u32 %s22, 4
      %s36 = sadd.s32 %s35, %s23
      %s37 = smul.u32 %s34, 4
      %s38 = sadd.s32 %s37, %s30
      %s39 = ssub.s32 %s36, %s38
      %p40 = scmp.eq.s32.totalorder %s39, 0
      %s42 = sadd.s32 %s41, 1
      %s43 = scalar_select %p40, %s41, %s42
      %p46 = pneg %p40
      %p47 = scmp.eq.s32.totalorder %s15, 3
      %p48 = por %p46, %p47
      %p49 = scmp.ne.s32.totalorder %s41, %s44
      %p50 = scmp.eq.s32.totalorder %s15, 0
      %p51 = por %p49, %p50
      %p52 = scmp.ne.s32.totalorder %s41, %s44
      %p53 = scmp.eq.s32.totalorder %s20, 3
      %p54 = por %p52, %p53
      %p55 = scmp.ne.s32.totalorder %s44, %s45
      %p56 = scmp.eq.s32.totalorder %s20, 0
      %p57 = por %p55, %p56
      %p58 = scmp.ne.s32.totalorder %s44, %s45
      %p59 = scmp.eq.s32.totalorder %s21, 3
      %p60 = por %p58, %p59
      %p62 = scmp.ne.s32.totalorder %s45, %s61
      %p63 = scmp.eq.s32.totalorder %s21, 0
      %p64 = por %p62, %p63
      %s65 = smul.u32 %s22, 4
      %s66 = sadd.s32 %s65, %s23
      %s67 = smul.u32 %s34, 4
      %s68 = sadd.s32 %s67, %s30
      %s69 = ssub.s32 %s66, %s68
      %p70 = scmp.eq.s32.totalorder %s69, 0
      %s72 = sadd.s32 %s71, 1
      %s73 = scalar_select %p70, %s71, %s72
      %p76 = pneg %p70
      %p77 = scmp.eq.s32.totalorder %s15, 3
      %p78 = por %p76, %p77
      %p79 = scmp.ne.s32.totalorder %s71, %s74
      %p80 = scmp.eq.s32.totalorder %s15, 0
      %p81 = por %p79, %p80
      %p82 = scmp.ne.s32.totalorder %s71, %s74
      %p83 = scmp.eq.s32.totalorder %s20, 3
      %p84 = por %p82, %p83
      %p85 = scmp.ne.s32.totalorder %s74, %s75
      %p86 = scmp.eq.s32.totalorder %s20, 0
      %p87 = por %p85, %p86
      %p88 = scmp.ne.s32.totalorder %s74, %s75
      %p89 = scmp.eq.s32.totalorder %s21, 3
      %p90 = por %p88, %p89
      %p92 = scmp.ne.s32.totalorder %s75, %s91
      %p93 = scmp.eq.s32.totalorder %s21, 0
      %p94 = por %p92, %p93
      %s95 = ssub.s32 %s22, %s34
      %p96 = scmp.eq.s32.totalorder %s95, 0
      %s98 = sadd.s32 %s97, 1
      %s99 = scalar_select %p96, %s97, %s98
      %p102 = pneg %p96
      %p103 = scmp.eq.s32.totalorder %s15, 3
      %p104 = por %p102, %p103
      %p105 = scmp.ne.s32.totalorder %s97, %s100
      %p106 = scmp.eq.s32.totalorder %s15, 0
      %p107 = por %p105, %p106
      %p108 = scmp.ne.s32.totalorder %s97, %s100
      %p109 = scmp.eq.s32.totalorder %s20, 3
      %p110 = por %p108, %p109
      %p111 = scmp.ne.s32.totalorder %s100, %s101
      %p112 = scmp.eq.s32.totalorder %s20, 0
      %p113 = por %p111, %p112
      %p114 = scmp.ne.s32.totalorder %s100, %s101
      %p115 = scmp.eq.s32.totalorder %s21, 3
      %p116 = por %p114, %p115
      %p118 = scmp.ne.s32.totalorder %s101, %s117
      %p119 = scmp.eq.s32.totalorder %s21, 0
      %p120 = por %p118, %p119
      %p121 = scmp.le.s32.totalorder 1, %s15
      %p122 = scmp.lt.s32.totalorder %s15, 5
      %p123 = pnand %p121, %p122
      %p124 = pneg %p123
      // Predicated region
      $region9: #{tpu_custom_call.1} parent=5 // pred_check
        _
      $region10: #{tpu_custom_call.1} parent=5 // pred_check_branch
        %126 = sbr.rel (%p123) target = $region12
      $region11: #{tpu_custom_call.1} parent=5 // pred_region
        %s127 = ssub.s32 %s15, 1
      $region12: #{tpu_custom_call.1} parent=5 // pred_fallthru
        _
      %p128 = scmp.lt.s32.totalorder %s15, 4
      // Predicated region
      $region13: #{tpu_custom_call.1} parent=5 // pred_check
        %p129 = pneg %p128
      $region14: #{tpu_custom_call.1} parent=5 // pred_check_branch
        %131 = sbr.rel (%p129) target = $region16
      $region15: #{tpu_custom_call.1} parent=5 // pred_region
        // Predicated region
        $region17: #{tpu_custom_call.1} parent=15 // pred_check
          %p132 = pneg %p51
        $region18: #{tpu_custom_call.1} parent=15 // pred_check_branch
          %134 = sbr.rel (%p132) target = $region20
        $region19: #{tpu_custom_call.1} parent=15 // pred_region
          %s135 = sand.u32 %s41, 1
          %s136 = scalar_lea.sflag [#allocation3], %s135
          %s137 = sand.u32 %s41, 1
          %s138 = smul.addr %s137, 256
          %s139 = scalar_lea.vmem [#allocation2], %s138
          %s140 = smul.u32 %s22, 4
          %s141 = sadd.s32 %s140, %s23
          %s142 = smul.u32 8, %s141
          %s144 = ssub.s32 4096, 4096
          %145 = vsyncadd %s136, %s144
          %s146 = smul.addr %s142, 4
          %s147 = smul.addr %s146, 128
          %s148 = scalar_lea.hbm %s0, %s147
          %s149 = sshll.u32 %s139, 4
          %s150 = int_to_ptr.vmem [resolvable:$true] %s149
          %155 = dma.hbm_to_vmem [thread:$0]  %s148, 4096, %s150, %s136, 512, 512, 32
        $region20: #{tpu_custom_call.1} parent=15 // pred_fallthru
          _
        // Predicated region
        $region21: #{tpu_custom_call.1} parent=15 // pred_check
          %p156 = pneg %p81
        $region22: #{tpu_custom_call.1} parent=15 // pred_check_branch
          %158 = sbr.rel (%p156) target = $region24
        $region23: #{tpu_custom_call.1} parent=15 // pred_region
          %s159 = sand.u32 %s71, 1
          %s160 = scalar_lea.sflag [#allocation6], %s159
          %s161 = sand.u32 %s71, 1
          %s162 = smul.addr %s161, 256
          %s163 = scalar_lea.vmem [#allocation5], %s162
          %s164 = smul.u32 %s22, 4
          %s165 = sadd.s32 %s164, %s23
          %s166 = smul.u32 8, %s165
          %s168 = ssub.s32 4096, 4096
          %169 = vsyncadd %s160, %s168
          %s170 = smul.addr %s166, 4
          %s171 = smul.addr %s170, 128
          %s172 = scalar_lea.hbm %s1, %s171
          %s173 = sshll.u32 %s163, 4
          %s174 = int_to_ptr.vmem [resolvable:$true] %s173
          %179 = dma.hbm_to_vmem [thread:$0]  %s172, 4096, %s174, %s160, 512, 512, 32
        $region24: #{tpu_custom_call.1} parent=15 // pred_fallthru
          _
      $region16: #{tpu_custom_call.1} parent=5 // pred_fallthru
        _
      %p180 = scmp.le.s32.totalorder 1, %s15
      %p181 = scmp.lt.s32.totalorder %s15, 5
      %p182 = pnand %p180, %p181
      %p183 = pneg %p182
      // Predicated region
      $region25: #{tpu_custom_call.1} parent=5 // pred_check
        _
      $region26: #{tpu_custom_call.1} parent=5 // pred_check_branch
        %185 = sbr.rel (%p182) target = $region28
      $region27: #{tpu_custom_call.1} parent=5 // pred_region
        %s186 = ssub.s32 %s15, 1
        %s187 = sand.u32 %s44, 1
        %s188 = scalar_lea.sflag [#allocation3], %s187
        %s189 = sand.u32 %s44, 1
        %s190 = smul.addr %s189, 256
        %s191 = scalar_lea.vmem [#allocation2], %s190
        // Predicated region
        $region29: #{tpu_custom_call.1} parent=27 // pred_check
          %p192 = pneg %p57
        $region30: #{tpu_custom_call.1} parent=27 // pred_check_branch
          %194 = sbr.rel (%p192) target = $region32
        $region31: #{tpu_custom_call.1} parent=27 // pred_region
          %195 = dma.done %s188, 4096
        $region32: #{tpu_custom_call.1} parent=27 // pred_fallthru
          _
        %s196 = sand.u32 %s74, 1
        %s197 = scalar_lea.sflag [#allocation6], %s196
        %s198 = sand.u32 %s74, 1
        %s199 = smul.addr %s198, 256
        %s200 = scalar_lea.vmem [#allocation5], %s199
        // Predicated region
        $region33: #{tpu_custom_call.1} parent=27 // pred_check
          %p201 = pneg %p87
        $region34: #{tpu_custom_call.1} parent=27 // pred_check_branch
          %203 = sbr.rel (%p201) target = $region36
        $region35: #{tpu_custom_call.1} parent=27 // pred_region
          %204 = dma.done %s197, 4096
        $region36: #{tpu_custom_call.1} parent=27 // pred_fallthru
          _
        %s205 = sand.u32 %s44, 1
        %s206 = scalar_lea.sflag [#allocation3], %s205
        %s207 = sand.u32 %s44, 1
        %s208 = smul.addr %s207, 256
        %s209 = scalar_lea.vmem [#allocation2], %s208
        %p210 = pneg %p57
        %p211 = pneg %p54
        %s212 = sand.u32 %s74, 1
        %s213 = scalar_lea.sflag [#allocation6], %s212
        %s214 = sand.u32 %s74, 1
        %s215 = smul.addr %s214, 256
        %s216 = scalar_lea.vmem [#allocation5], %s215
        %p217 = pneg %p87
        %p218 = pneg %p84
        %p219 = pneg %p113
        %p220 = pneg %p110
        %s221 = smul.u32 %s24, 4
        %s222 = sadd.s32 %s221, %s25
        %s223 = smul.u32 8, %s222
        %s224 = smul.u32 %s24, 4
        %s225 = sadd.s32 %s224, %s25
        %s226 = smul.u32 8, %s225
        %p227 = scmp.eq.s32.totalorder %s25, 0
        // Predicated region
        $region37: #{tpu_custom_call.1} parent=27 // pred_check
          %p228 = pneg %p227
        $region38: #{tpu_custom_call.1} parent=27 // pred_check_branch
          %230 = sbr.rel (%p228) target = $region40
        $region39: #{tpu_custom_call.1} parent=27 // pred_region
          %231 = vst [vmem:[#allocation7] sm:$0xff] 0.0
          %232 = vst [vmem:[#allocation7 + $0x8] sm:$0xff] 0.0
          %233 = vst [vmem:[#allocation7 + $0x10] sm:$0xff] 0.0
          %234 = vst [vmem:[#allocation7 + $0x18] sm:$0xff] 0.0
        $region40: #{tpu_custom_call.1} parent=27 // pred_fallthru
          _
        %v235 = vld [vmem:[%s191] sm:$0xff]
        %v236 = vld [vmem:[%s191 + $0x8] sm:$0xff]
        %v237 = vld [vmem:[%s191 + $0x10] sm:$0xff]
        %v238 = vld [vmem:[%s191 + $0x18] sm:$0xff]
        %v239 = vld [vmem:[%s191 + $0x20] sm:$0xff]
        %v240 = vld [vmem:[%s191 + $0x28] sm:$0xff]
        %v241 = vld [vmem:[%s191 + $0x30] sm:$0xff]
        %v242 = vld [vmem:[%s191 + $0x38] sm:$0xff]
        %v243 = vld [vmem:[%s191 + $0x40] sm:$0xff]
        %v244 = vld [vmem:[%s191 + $0x48] sm:$0xff]
        %v245 = vld [vmem:[%s191 + $0x50] sm:$0xff]
        %v246 = vld [vmem:[%s191 + $0x58] sm:$0xff]
        %v247 = vld [vmem:[%s191 + $0x60] sm:$0xff]
        %v248 = vld [vmem:[%s191 + $0x68] sm:$0xff]
        %v249 = vld [vmem:[%s191 + $0x70] sm:$0xff]
        %v250 = vld [vmem:[%s191 + $0x78] sm:$0xff]
        %v251 = vld [vmem:[%s191 + $0x80] sm:$0xff]
        %v252 = vld [vmem:[%s191 + $0x88] sm:$0xff]
        %v253 = vld [vmem:[%s191 + $0x90] sm:$0xff]
        %v254 = vld [vmem:[%s191 + $0x98] sm:$0xff]
        %v255 = vld [vmem:[%s191 + $0xa0] sm:$0xff]
        %v256 = vld [vmem:[%s191 + $0xa8] sm:$0xff]
        %v257 = vld [vmem:[%s191 + $0xb0] sm:$0xff]
        %v258 = vld [vmem:[%s191 + $0xb8] sm:$0xff]
        %v259 = vld [vmem:[%s191 + $0xc0] sm:$0xff]
        %v260 = vld [vmem:[%s191 + $0xc8] sm:$0xff]
        %v261 = vld [vmem:[%s191 + $0xd0] sm:$0xff]
        %v262 = vld [vmem:[%s191 + $0xd8] sm:$0xff]
        %v263 = vld [vmem:[%s191 + $0xe0] sm:$0xff]
        %v264 = vld [vmem:[%s191 + $0xe8] sm:$0xff]
        %v265 = vld [vmem:[%s191 + $0xf0] sm:$0xff]
        %v266 = vld [vmem:[%s191 + $0xf8] sm:$0xff]
        %v267 = vld [vmem:[%s200] sm:$0xff]
        %v268 = vld [vmem:[%s200 + $0x8] sm:$0xff]
        %v269 = vld [vmem:[%s200 + $0x10] sm:$0xff]
        %v270 = vld [vmem:[%s200 + $0x18] sm:$0xff]
        %v271 = vld [vmem:[%s200 + $0x20] sm:$0xff]
        %v272 = vld [vmem:[%s200 + $0x28] sm:$0xff]
        %v273 = vld [vmem:[%s200 + $0x30] sm:$0xff]
        %v274 = vld [vmem:[%s200 + $0x38] sm:$0xff]
        %v275 = vld [vmem:[%s200 + $0x40] sm:$0xff]
        %v276 = vld [vmem:[%s200 + $0x48] sm:$0xff]
        %v277 = vld [vmem:[%s200 + $0x50] sm:$0xff]
        %v278 = vld [vmem:[%s200 + $0x58] sm:$0xff]
        %v279 = vld [vmem:[%s200 + $0x60] sm:$0xff]
        %v280 = vld [vmem:[%s200 + $0x68] sm:$0xff]
        %v281 = vld [vmem:[%s200 + $0x70] sm:$0xff]
        %v282 = vld [vmem:[%s200 + $0x78] sm:$0xff]
        %v283 = vld [vmem:[%s200 + $0x80] sm:$0xff]
        %v284 = vld [vmem:[%s200 + $0x88] sm:$0xff]
        %v285 = vld [vmem:[%s200 + $0x90] sm:$0xff]
        %v286 = vld [vmem:[%s200 + $0x98] sm:$0xff]
        %v287 = vld [vmem:[%s200 + $0xa0] sm:$0xff]
        %v288 = vld [vmem:[%s200 + $0xa8] sm:$0xff]
        %v289 = vld [vmem:[%s200 + $0xb0] sm:$0xff]
        %v290 = vld [vmem:[%s200 + $0xb8] sm:$0xff]
        %v291 = vld [vmem:[%s200 + $0xc0] sm:$0xff]
        %v292 = vld [vmem:[%s200 + $0xc8] sm:$0xff]
        %v293 = vld [vmem:[%s200 + $0xd0] sm:$0xff]
        %v294 = vld [vmem:[%s200 + $0xd8] sm:$0xff]
        %v295 = vld [vmem:[%s200 + $0xe0] sm:$0xff]
        %v296 = vld [vmem:[%s200 + $0xe8] sm:$0xff]
        %v297 = vld [vmem:[%s200 + $0xf0] sm:$0xff]
        %v298 = vld [vmem:[%s200 + $0xf8] sm:$0xff]
        %v299 = vsub.f32 %v235, %v267
        %v300 = vsub.f32 %v236, %v268
        %v301 = vsub.f32 %v237, %v269
        %v302 = vsub.f32 %v238, %v270
        %v303 = vsub.f32 %v239, %v271
        %v304 = vsub.f32 %v240, %v272
        %v305 = vsub.f32 %v241, %v273
        %v306 = vsub.f32 %v242, %v274
        %v307 = vsub.f32 %v243, %v275
        %v308 = vsub.f32 %v244, %v276
        %v309 = vsub.f32 %v245, %v277
        %v310 = vsub.f32 %v246, %v278
        %v311 = vsub.f32 %v247, %v279
        %v312 = vsub.f32 %v248, %v280
        %v313 = vsub.f32 %v249, %v281
        %v314 = vsub.f32 %v250, %v282
        %v315 = vsub.f32 %v251, %v283
        %v316 = vsub.f32 %v252, %v284
        %v317 = vsub.f32 %v253, %v285
        %v318 = vsub.f32 %v254, %v286
        %v319 = vsub.f32 %v255, %v287
        %v320 = vsub.f32 %v256, %v288
        %v321 = vsub.f32 %v257, %v289
        %v322 = vsub.f32 %v258, %v290
        %v323 = vsub.f32 %v259, %v291
        %v324 = vsub.f32 %v260, %v292
        %v325 = vsub.f32 %v261, %v293
        %v326 = vsub.f32 %v262, %v294
        %v327 = vsub.f32 %v263, %v295
        %v328 = vsub.f32 %v264, %v296
        %v329 = vsub.f32 %v265, %v297
        %v330 = vsub.f32 %v266, %v298
        %v331 = vmul.f32 %v299, %v299
        %v332 = vmul.f32 %v300, %v300
        %v333 = vmul.f32 %v301, %v301
        %v334 = vmul.f32 %v302, %v302
        %v335 = vmul.f32 %v303, %v303
        %v336 = vmul.f32 %v304, %v304
        %v337 = vmul.f32 %v305, %v305
        %v338 = vmul.f32 %v306, %v306
        %v339 = vmul.f32 %v307, %v307
        %v340 = vmul.f32 %v308, %v308
        %v341 = vmul.f32 %v309, %v309
        %v342 = vmul.f32 %v310, %v310
        %v343 = vmul.f32 %v311, %v311
        %v344 = vmul.f32 %v312, %v312
        %v345 = vmul.f32 %v313, %v313
        %v346 = vmul.f32 %v314, %v314
        %v347 = vmul.f32 %v315, %v315
        %v348 = vmul.f32 %v316, %v316
        %v349 = vmul.f32 %v317, %v317
        %v350 = vmul.f32 %v318, %v318
        %v351 = vmul.f32 %v319, %v319
        %v352 = vmul.f32 %v320, %v320
        %v353 = vmul.f32 %v321, %v321
        %v354 = vmul.f32 %v322, %v322
        %v355 = vmul.f32 %v323, %v323
        %v356 = vmul.f32 %v324, %v324
        %v357 = vmul.f32 %v325, %v325
        %v358 = vmul.f32 %v326, %v326
        %v359 = vmul.f32 %v327, %v327
        %v360 = vmul.f32 %v328, %v328
        %v361 = vmul.f32 %v329, %v329
        %v362 = vmul.f32 %v330, %v330
        %v363 = vld [vmem:[#allocation7] sm:$0xff]
        %v364 = vld [vmem:[#allocation7 + $0x8] sm:$0xff]
        %v365 = vld [vmem:[#allocation7 + $0x10] sm:$0xff]
        %v366 = vld [vmem:[#allocation7 + $0x18] sm:$0xff]
        %v367 = vadd.f32 %v331, %v335
        %v368 = vadd.f32 %v367, %v339
        %v369 = vadd.f32 %v368, %v343
        %v370 = vadd.f32 %v369, %v347
        %v371 = vadd.f32 %v370, %v351
        %v372 = vadd.f32 %v371, %v355
        %v373 = vadd.f32 %v372, %v359
        %v374 = vadd.f32 %v332, %v336
        %v375 = vadd.f32 %v374, %v340
        %v376 = vadd.f32 %v375, %v344
        %v377 = vadd.f32 %v376, %v348
        %v378 = vadd.f32 %v377, %v352
        %v379 = vadd.f32 %v378, %v356
        %v380 = vadd.f32 %v379, %v360
        %v381 = vadd.f32 %v333, %v337
        %v382 = vadd.f32 %v381, %v341
        %v383 = vadd.f32 %v382, %v345
        %v384 = vadd.f32 %v383, %v349
        %v385 = vadd.f32 %v384, %v353
        %v386 = vadd.f32 %v385, %v357
        %v387 = vadd.f32 %v386, %v361
        %v388 = vadd.f32 %v334, %v338
        %v389 = vadd.f32 %v388, %v342
        %v390 = vadd.f32 %v389, %v346
        %v391 = vadd.f32 %v390, %v350
        %v392 = vadd.f32 %v391, %v354
        %v393 = vadd.f32 %v392, %v358
        %v394 = vadd.f32 %v393, %v362
        %v395 = vadd.f32 %v363, %v373
        %v396 = vadd.f32 %v364, %v380
        %v397 = vadd.f32 %v365, %v387
        %v398 = vadd.f32 %v366, %v394
        %399 = vst [vmem:[#allocation7] sm:$0xff] %v395
        %400 = vst [vmem:[#allocation7 + $0x8] sm:$0xff] %v396
        %401 = vst [vmem:[#allocation7 + $0x10] sm:$0xff] %v397
        %402 = vst [vmem:[#allocation7 + $0x18] sm:$0xff] %v398
        // Predicated region
        $region41: #{tpu_custom_call.1} parent=27 // pred_check
          %p403 = pneg %p110
        $region42: #{tpu_custom_call.1} parent=27 // pred_check_branch
          %405 = sbr.rel (%p403) target = $region44
        $region43: #{tpu_custom_call.1} parent=27 // pred_region
          %s407 = ssub.s32 512, 512
          %408 = vsyncadd [#allocation4], %s407
          %s409 = smul.addr %s24, 4
          %s410 = smul.addr %s409, 128
          %s411 = scalar_lea.hbm %s2, %s410
          %s413 = sshll.u32 [#allocation7], 4
          %s414 = int_to_ptr.vmem [resolvable:$true] %s413
          %416 = dma.vmem_to_hbm [thread:$0]  %s414, 512, %s411, [#allocation4]
        $region44: #{tpu_custom_call.1} parent=27 // pred_fallthru
          _
        // Predicated region
        $region45: #{tpu_custom_call.1} parent=27 // pred_check
          %p417 = pneg %p110
        $region46: #{tpu_custom_call.1} parent=27 // pred_check_branch
          %419 = sbr.rel (%p417) target = $region48
        $region47: #{tpu_custom_call.1} parent=27 // pred_region
          %420 = dma.done [#allocation4], 512
        $region48: #{tpu_custom_call.1} parent=27 // pred_fallthru
          _
      $region28: #{tpu_custom_call.1} parent=5 // pred_fallthru
        _
      %p421 = scmp.le.s32.totalorder 2, %s15
      // Predicated region
      $region49: #{tpu_custom_call.1} parent=5 // pred_check
        %p422 = pneg %p421
      $region50: #{tpu_custom_call.1} parent=5 // pred_check_branch
        %424 = sbr.rel (%p422) target = $region52
      $region51: #{tpu_custom_call.1} parent=5 // pred_region
        %s425 = ssub.s32 %s15, 2
      $region52: #{tpu_custom_call.1} parent=5 // pred_fallthru
        _
    $region6: #{tpu_custom_call.1} parent=1 // loop_footer
      %s19 = sadd.s32 1, %s15
    $region7: #{tpu_custom_call.1} parent=1 // loop_footer_branch
      %14 = sbr.rel target = $region3
    $region8: #{tpu_custom_call.1} parent=1 // loop_exit
      _
    %426 = vsyncpa [#allocation3], 1
    %s427 = scalar_lea.sflag [#allocation3], 1
    %428 = vsyncpa %s427, 1
    %429 = vsyncpa [#allocation6], 1
    %s430 = scalar_lea.sflag [#allocation6], 1
    %431 = vsyncpa %s430, 1
    %432 = vsyncpa [#allocation4], 1
    %s433 = scalar_lea.sflag [#allocation4], 1
    %434 = vsyncpa %s433, 1

</llo_original>
